<compile_context>
chip_gen: v7x
topology: tpu7x:2x2x1
jax: 0.10.0
libtpu: 0.0.40
codegen_flags: <defaults>
</compile_context>

<pallas_src>
import functools
import math

import jax
import jax.numpy as jnp
from jax.experimental import pallas as pl
from jax.experimental.pallas import tpu as pltpu

NEG_LOGIT = -100000.0
TIME_TILE = 8        # fixed time tile; S is padded (mask=0) to a multiple of it


def _round_up(x, m):
    return ((x + m - 1) // m) * m


# ----------------------------------------------------------------------------
# Hoisted input projection: one tiled MXU matmul (bf16 operands, f32 acc) for
# every timestep of BOTH directions:  gates = x @ [W_ih_f | W_ih_b] + bias.
# ----------------------------------------------------------------------------
def _linear_kernel(x_ref, w_ref, b_ref, o_ref):
    o_ref[...] = (jnp.dot(x_ref[...], w_ref[...],
                          preferred_element_type=jnp.float32) + b_ref[...])


def linear_rows(x_bf16, w_bf16, b_f32, row_tile=512):
    """x: [M, H] bf16, w: [H, N] bf16, b: [1, N] f32 -> [M, N] f32."""
    M, H = x_bf16.shape
    N = w_bf16.shape[-1]
    tm = min(row_tile, _round_up(M, 8))
    Mp = pl.cdiv(M, tm) * tm
    if Mp != M:
        x_bf16 = jnp.pad(x_bf16, ((0, Mp - M), (0, 0)))
    out = pl.pallas_call(
        _linear_kernel,
        grid=(Mp // tm,),
        in_specs=[
            pl.BlockSpec((tm, H), lambda i: (i, 0)),
            pl.BlockSpec((H, N), lambda i: (0, 0)),
            pl.BlockSpec((1, N), lambda i: (0, 0)),
        ],
        out_specs=pl.BlockSpec((tm, N), lambda i: (i, 0)),
        out_shape=jax.ShapeDtypeStruct((Mp, N), jnp.float32),
        compiler_params=pltpu.CompilerParams(
            dimension_semantics=("parallel",)),
    )(x_bf16, w_bf16, b_f32)
    return out[:M]


# ----------------------------------------------------------------------------
# Bidirectional LSTM recurrence, both directions interleaved in one kernel.
# Forward walks time tiles 0..ntt-1; backward walks the SAME (un-reversed)
# inputs via a reversed index_map + reversed step order inside the tile.
# Mask gating (jnp.where) freezes state at pad positions and zeroes outputs,
# matching pack_padded_sequence / pad_packed_sequence semantics.
# ----------------------------------------------------------------------------
def _bilstm_kernel(gxf_ref, gxb_ref, mf_ref, mb_ref, whf_ref, whb_ref,
                   outf_ref, outb_ref, hff_ref, hfb_ref,
                   hf_sc, cf_sc, hb_sc, cb_sc, *, tt, hh):
    t = pl.program_id(0)

    @pl.when(t == 0)
    def _():
        hf_sc[...] = jnp.zeros_like(hf_sc)
        cf_sc[...] = jnp.zeros_like(cf_sc)
        hb_sc[...] = jnp.zeros_like(hb_sc)
        cb_sc[...] = jnp.zeros_like(cb_sc)

    whf = whf_ref[...]
    whb = whb_ref[...]
    hf, cf = hf_sc[...], cf_sc[...]
    hb, cb = hb_sc[...], cb_sc[...]

    def cell(gx, m, h, c, whh):
        gates = gx + jnp.dot(h, whh, preferred_element_type=jnp.float32)
        sig = jax.nn.sigmoid(gates[:, :3 * hh])      # (i, f, o) contiguous
        g_g = jnp.tanh(gates[:, 3 * hh:])            # g
        c_new = sig[:, hh:2 * hh] * c + sig[:, :hh] * g_g
        h_new = sig[:, 2 * hh:3 * hh] * jnp.tanh(c_new)
        keep = m > 0.0                               # [Bp, 1] bool
        return (jnp.where(keep, h_new, h),
                jnp.where(keep, c_new, c),
                jnp.where(keep, h_new, 0.0))

    # Interleaved, fully unrolled inner time loop (two independent chains).
    for s in range(tt):
        sb = tt - 1 - s
        hf, cf, of = cell(gxf_ref[s], mf_ref[s], hf, cf, whf)
        hb, cb, ob = cell(gxb_ref[sb], mb_ref[sb], hb, cb, whb)
        outf_ref[s] = of
        outb_ref[sb] = ob

    hf_sc[...] = hf
    cf_sc[...] = cf
    hb_sc[...] = hb
    cb_sc[...] = cb

    @pl.when(t == pl.num_programs(0) - 1)
    def _():
        hff_ref[...] = hf                 # state at last valid step (fwd)
        hfb_ref[...] = hb                 # state after position 0 (bwd)


def bilstm(gx_f, gx_b, mask_tm, w_hh_f, w_hh_b, tt):
    """gx_*: [S_pad, Bp, 4*hh] f32, mask_tm: [S_pad, Bp, 1] f32, w_hh_*: [hh, 4*hh]."""
    S_pad, Bp, G = gx_f.shape
    hh = G // 4
    ntt = S_pad // tt
    fwd3 = lambda t: (t, 0, 0)
    bwd3 = lambda t: (ntt - 1 - t, 0, 0)
    const2 = lambda t: (0, 0)
    return pl.pallas_call(
        functools.partial(_bilstm_kernel, tt=tt, hh=hh),
        grid=(ntt,),
        in_specs=[
            pl.BlockSpec((tt, Bp, G), fwd3),
            pl.BlockSpec((tt, Bp, G), bwd3),
            pl.BlockSpec((tt, Bp, 1), fwd3),
            pl.BlockSpec((tt, Bp, 1), bwd3),
            pl.BlockSpec((hh, G), const2),
            pl.BlockSpec((hh, G), const2),
        ],
        out_specs=[
            pl.BlockSpec((tt, Bp, hh), fwd3),
            pl.BlockSpec((tt, Bp, hh), bwd3),
            pl.BlockSpec((Bp, hh), const2),
            pl.BlockSpec((Bp, hh), const2),
        ],
        out_shape=[
            jax.ShapeDtypeStruct((S_pad, Bp, hh), jnp.float32),
            jax.ShapeDtypeStruct((S_pad, Bp, hh), jnp.float32),
            jax.ShapeDtypeStruct((Bp, hh), jnp.float32),
            jax.ShapeDtypeStruct((Bp, hh), jnp.float32),
        ],
        scratch_shapes=[pltpu.VMEM((Bp, hh), jnp.float32)] * 4,
        compiler_params=pltpu.CompilerParams(
            dimension_semantics=("arbitrary",)),
    )(gx_f, gx_b, mask_tm, mask_tm, w_hh_f, w_hh_b)


# ----------------------------------------------------------------------------
# Fused hidden2tag + CRF log-partition + Viterbi.  Tag axis padded lane-dense
# to 128; log-partition step is an exp-space MXU matmul; emission is added
# after the Viterbi max; backpointers stored as int8; DP paths compile-time
# gated by (compute_z, compute_v); steps past the true seq length are
# select-gated (only when S was padded).
# ----------------------------------------------------------------------------
def _crf_kernel(enc_ref, w_ref, b_ref, trans_ref, exp_trans_t_ref, *refs,
                tt, seq_len, padded_len, start_tag, end_tag,
                compute_z, compute_v):
    rest = list(refs)
    bp_ref = rest.pop(0) if compute_v else None
    vfin_ref = rest.pop(0) if compute_v else None
    logz_ref = rest.pop(0) if compute_z else None
    dpz_sc = rest.pop(0) if compute_z else None
    dpv_sc = rest.pop(0) if compute_v else None

    ti = pl.program_id(1)
    ntt = pl.num_programs(1)
    any_sc = dpz_sc if compute_z else dpv_sc
    bb, Tp = any_sc.shape
    gate_tail = padded_len != seq_len             # static python bool

    @pl.when(ti == 0)
    def _():
        col = jax.lax.broadcasted_iota(jnp.int32, (bb, Tp), 1)
        init = jnp.where(col == start_tag, 0.0, NEG_LOGIT).astype(jnp.float32)
        if compute_z:
            dpz_sc[...] = init
        if compute_v:
            dpv_sc[...] = init

    trans = trans_ref[...]                        # [Tp_cur, Tp_prev], log space
    exp_trans_t = exp_trans_t_ref[...]            # [Tp_prev, Tp_cur], exp space
    w_emit = w_ref[...]                           # bf16 [H, Tp]
    b_emit = b_ref[...]                           # f32  [1, Tp]

    dpz = dpz_sc[...] if compute_z else None
    dpv = dpv_sc[...] if compute_v else None
    for s in range(tt):
        # Fused emission projection: bf16 x bf16 -> f32 MXU matmul per step.
        emit_t = (jnp.dot(enc_ref[s], w_emit,
                          preferred_element_type=jnp.float32) + b_emit)
        if compute_z:
            # logsumexp over previous tag as an exp-space MXU matmul.
            m_b = jnp.max(dpz, axis=-1, keepdims=True)
            acc = jnp.dot(jnp.exp(dpz - m_b), exp_trans_t,
                          preferred_element_type=jnp.float32)
            dpz_new = emit_t + m_b + jnp.log(acc)
        if compute_v:
            # Emission is constant in prev: add it after the max/argmax reduce.
            cur_v = trans[None, :, :] + dpv[:, None, :]        # [bb, Tp, Tp]
            dpv_new = jnp.max(cur_v, axis=-1) + emit_t
            bp_ref[s] = jnp.argmax(cur_v, axis=-1).astype(jnp.int8)
        if gate_tail:
            valid = ti * tt + s < seq_len
            if compute_z:
                dpz = jnp.where(valid, dpz_new, dpz)
            if compute_v:
                dpv = jnp.where(valid, dpv_new, dpv)
        else:
            if compute_z:
                dpz = dpz_new
            if compute_v:
                dpv = dpv_new
    if compute_z:
        dpz_sc[...] = dpz
    if compute_v:
        dpv_sc[...] = dpv

    @pl.when(ti == ntt - 1)
    def _():
        end_row = trans[end_tag, :][None, :]
        if compute_z:
            fz = dpz + end_row
            fm = jnp.max(fz, axis=-1, keepdims=True)
            logz = fm[..., 0] + jnp.log(jnp.sum(jnp.exp(fz - fm), axis=-1))
            logz_ref[...] = jnp.broadcast_to(logz[:, None], (bb, Tp))
        if compute_v:
            vfin_ref[...] = dpv + end_row


def crf_forward(enc_bf16, w_bf16, b_pad, trans_pad, exp_trans_t, seq_len,
                start_tag, end_tag, tt, compute_z, compute_v, batch_tile=8):
    """enc: [S_pad, Bp, H] bf16; w: [H, Tp] bf16; b: [1, Tp]; trans: [Tp, Tp]."""
    S_pad, Bp, H = enc_bf16.shape
    Tp = trans_pad.shape[0]
    bb = min(batch_tile, Bp)
    nbt = Bp // bb
    ntt = S_pad // tt

    enc3 = lambda bi, ti: (ti, bi, 0)
    row2 = lambda bi, ti: (bi, 0)
    const2 = lambda bi, ti: (0, 0)

    out_shape, out_specs = [], []
    if compute_v:
        out_shape += [jax.ShapeDtypeStruct((S_pad, Bp, Tp), jnp.int8),
                      jax.ShapeDtypeStruct((Bp, Tp), jnp.float32)]
        out_specs += [pl.BlockSpec((tt, bb, Tp), enc3),
                      pl.BlockSpec((bb, Tp), row2)]
    if compute_z:
        out_shape += [jax.ShapeDtypeStruct((Bp, Tp), jnp.float32)]
        out_specs += [pl.BlockSpec((bb, Tp), row2)]

    scratch = []
    if compute_z:
        scratch.append(pltpu.VMEM((bb, Tp), jnp.float32))
    if compute_v:
        scratch.append(pltpu.VMEM((bb, Tp), jnp.float32))

    outs = pl.pallas_call(
        functools.partial(_crf_kernel, tt=tt, seq_len=seq_len, padded_len=S_pad,
                          start_tag=start_tag, end_tag=end_tag,
                          compute_z=compute_z, compute_v=compute_v),
        grid=(nbt, ntt),
        in_specs=[
            pl.BlockSpec((tt, bb, H), enc3),
            pl.BlockSpec((H, Tp), const2),
            pl.BlockSpec((1, Tp), const2),
            pl.BlockSpec((Tp, Tp), const2),
            pl.BlockSpec((Tp, Tp), const2),
        ],
        out_specs=out_specs,
        out_shape=out_shape,
        scratch_shapes=scratch,
        compiler_params=pltpu.CompilerParams(
            dimension_semantics=("parallel", "arbitrary")),
    )(enc_bf16, w_bf16, b_pad, trans_pad, exp_trans_t)

    outs = list(outs) if isinstance(outs, (list, tuple)) else [outs]
    res, i = {}, 0
    if compute_v:
        res["bp"], res["vfin"] = outs[i], outs[i + 1]
        i += 2
    if compute_z:
        res["logz"] = outs[i]
    return res


# ----------------------------------------------------------------------------
# Full model forward (CommonNERTokenEmbedding + BiLSTM + CRFLayer).
# ----------------------------------------------------------------------------
def lstm_crf_ner_forward(params, cfg, input_ids, input_masks, label_ids=None,
                         train_flag=True, decode_flag=True):
    B, S = input_ids.shape
    H = cfg["hidden_size"]
    hh = H // 2
    T = cfg["num_entity_labels"] + 2
    start_tag, end_tag = T - 2, T - 1
    Tp = max(128, _round_up(T, 128))          # lane-dense padded tag axis
    Bp = _round_up(B, 8)                      # sublane-padded batch
    tt = TIME_TILE
    S_pad = _round_up(S, tt)                  # padded seq (mask=0 at pads)

    ids_p = jnp.pad(input_ids, ((0, Bp - B), (0, S_pad - S)))
    mask_p = jnp.pad(input_masks, ((0, Bp - B), (0, S_pad - S)))
    mask_f = (mask_p == 1).astype(jnp.float32)

    # ---- token embedding (gather); dropout is identity in eval -------------
    emb = jnp.take(params["tok_emb"], ids_p, axis=0)            # [Bp, S_pad, H]
    x_tm = jnp.transpose(emb, (1, 0, 2))                        # [S_pad, Bp, H]
    m_tm = jnp.transpose(mask_f, (1, 0))[:, :, None]            # [S_pad, Bp, 1]

    # ---- repack gates (i,f,g,o) -> (i,f,o,g): contiguous sigmoid/tanh slices
    def reorder_gates(w):
        i, f, g, o = jnp.split(w, 4, axis=-1)
        return jnp.concatenate([i, f, o, g], axis=-1)

    w_ih = jnp.concatenate([reorder_gates(params["w_ih_f"]),
                            reorder_gates(params["w_ih_b"])], axis=-1)  # [H, 8hh]
    b_ih = jnp.concatenate([reorder_gates(params["b_f"]),
                            reorder_gates(params["b_b"])], axis=-1)     # [1, 8hh]

    # ---- hoisted input projection: one bf16 MXU matmul for both directions -
    gates_all = linear_rows(
        x_tm.reshape(S_pad * Bp, H).astype(jnp.bfloat16),
        w_ih.astype(jnp.bfloat16), b_ih).reshape(S_pad, Bp, 8 * hh)
    gx_f = gates_all[..., :4 * hh]
    gx_b = gates_all[..., 4 * hh:]

    # ---- bidirectional LSTM (interleaved directions, no reversal gathers) --
    out_f, out_b, hfin_f, hfin_b = bilstm(
        gx_f, gx_b, m_tm,
        reorder_gates(params["w_hh_f"]), reorder_gates(params["w_hh_b"]), tt)

    enc_tm_p = jnp.concatenate([out_f, out_b], axis=-1)          # [S_pad, Bp, H]
    batch_seq_enc = jnp.transpose(enc_tm_p, (1, 0, 2))[:B, :S]   # [B, S, H]
    sent_reps = jnp.concatenate([hfin_f, hfin_b], axis=-1)[:B]   # [B, H]

    # ---- fused hidden2tag + CRF partition + Viterbi -------------------------
    need_crf = train_flag or decode_flag
    if need_crf:
        w_pad = jnp.zeros((H, Tp), jnp.float32).at[:, :T].set(params["h2t_w"])
        b_pad = jnp.full((1, Tp), NEG_LOGIT, jnp.float32).at[:, :T].set(
            params["h2t_b"][0])
        trans_pad = jnp.full((Tp, Tp), NEG_LOGIT, jnp.float32).at[:T, :T].set(
            params["trans"])
        exp_trans_t = jnp.exp(trans_pad).T        # padded entries exp(-1e5) = 0
        crf = crf_forward(enc_tm_p.astype(jnp.bfloat16),
                          w_pad.astype(jnp.bfloat16), b_pad, trans_pad,
                          exp_trans_t, S, start_tag, end_tag, tt,
                          compute_z=train_flag, compute_v=decode_flag)

    if train_flag:
        # Gold score (matches reference: sums over all S positions incl. pads,
        # end transition taken from the label at position S-1).
        trans = params["trans"]
        labels_tm = jnp.transpose(label_ids, (1, 0)).astype(jnp.int32)     # [S, B]
        cur_lab = jnp.concatenate(
            [labels_tm, jnp.full((1, B), end_tag, jnp.int32)], axis=0)
        prev_lab = jnp.concatenate(
            [jnp.full((1, B), start_tag, jnp.int32), labels_tm], axis=0)
        batch_trans_score = trans[cur_lab, prev_lab].sum(axis=0)           # [B]
        enc_tm = jnp.transpose(batch_seq_enc, (1, 0, 2))                   # [S, B, H]
        w_gold = params["h2t_w"].T[labels_tm]                              # [S, B, H]
        gold_emit = (jnp.sum(enc_tm * w_gold, axis=-1)
                     + params["h2t_b"][0][labels_tm])                      # [S, B]
        gold_score = batch_trans_score + gold_emit.sum(axis=0)
        log_partition = crf["logz"][:B, 0]
        ner_loss = log_partition - gold_score
    else:
        ner_loss = None

    if decode_flag:
        vfin = crf["vfin"][:B, :T]                                         # [B, T]
        best0 = jnp.argmax(vfin, axis=-1).astype(jnp.int32)                # [B]
        bp_b = crf["bp"][:S, :B, :].astype(jnp.int32)                      # [S, B, Tp]

        def bt_step(best, bp_t):
            prev = jnp.take_along_axis(bp_t, best[:, None], axis=1)[:, 0]
            return prev, best

        _, ys = jax.lax.scan(bt_step, best0, bp_b[::-1])                   # [S, B]
        batch_seq_preds = jnp.transpose(ys[::-1], (1, 0))                  # [B, S]
    else:
        batch_seq_preds = None

    return batch_seq_enc, ner_loss, batch_seq_preds, sent_reps


# ----------------------------------------------------------------------------
# Deterministic synthetic parameter init (shapes per the module __init__).
# ----------------------------------------------------------------------------
def init_params(key, cfg):
    H = cfg["hidden_size"]
    hh = H // 2
    V = cfg["vocab_size"]
    T = cfg["num_entity_labels"] + 2
    ks = jax.random.split(key, 12)

    def u(k, shape, bound):
        return jax.random.uniform(k, shape, jnp.float32, -bound, bound)

    lb = 1.0 / math.sqrt(hh)
    hb = 1.0 / math.sqrt(H)
    params = {
        "tok_emb": jax.random.normal(ks[0], (V, H), jnp.float32),
        # LSTM weights stored pre-transposed for x @ W ; gate order i, f, g, o.
        "w_ih_f": u(ks[1], (H, 4 * hh), lb),
        "w_hh_f": u(ks[2], (hh, 4 * hh), lb),
        "b_f": u(ks[3], (1, 4 * hh), lb) + u(ks[4], (1, 4 * hh), lb),   # b_ih + b_hh
        "w_ih_b": u(ks[5], (H, 4 * hh), lb),
        "w_hh_b": u(ks[6], (hh, 4 * hh), lb),
        "b_b": u(ks[7], (1, 4 * hh), lb) + u(ks[8], (1, 4 * hh), lb),
        "h2t_w": u(ks[9], (H, T), hb),
        "h2t_b": u(ks[10], (1, T), hb),
    }
    trans = u(ks[11], (T, T), math.sqrt(6.0 / T))   # ~kaiming_uniform(a=sqrt(5))
    start_tag, end_tag = T - 2, T - 1
    trans = trans.at[start_tag, :].set(NEG_LOGIT)
    trans = trans.at[:, end_tag].set(NEG_LOGIT)
    params["trans"] = trans
    return params


if __name__ == "__main__":
    cfg = dict(vocab_size=100, hidden_size=32, num_entity_labels=7,
               num_lstm_layers=1, max_sent_len=8, dropout=0.1, use_crf_layer=True)
    key = jax.random.PRNGKey(0)
    pk, dk = jax.random.split(key)
    params = init_params(pk, cfg)

    B, S = 2, 8
    k1, k2 = jax.random.split(dk)
    input_ids = jax.random.randint(k1, (B, S), 0, cfg["vocab_size"], jnp.int32)
    seq_lens = jnp.array([8, 5], jnp.int32)
    input_masks = (jnp.arange(S)[None, :] < seq_lens[:, None]).astype(jnp.int32)
    label_ids = jax.random.randint(k2, (B, S), 0, cfg["num_entity_labels"], jnp.int32)

    enc, loss, preds, reps = lstm_crf_ner_forward(
        params, cfg, input_ids, input_masks, label_ids,
        train_flag=True, decode_flag=True)
    jax.block_until_ready((enc, loss, preds, reps))
    assert enc.shape == (B, S, cfg["hidden_size"])
    assert loss.shape == (B,)
    assert preds.shape == (B, S)
    assert reps.shape == (B, cfg["hidden_size"])
    assert bool(jnp.all(jnp.isfinite(loss)))
    print("KERNEL_OK")
</pallas_src>

<mosaic_0001>
module attributes {stable_mosaic.version = 11 : i64} {
  func.func @_linear_kernel(%arg0: i32, %arg1: memref<64x32xbf16, #tpu.memory_space<vmem>>, %arg2: memref<32x128xbf16, #tpu.memory_space<vmem>>, %arg3: memref<1x128xf32, #tpu.memory_space<vmem>>, %arg4: memref<64x128xf32, #tpu.memory_space<vmem>>) attributes {dimension_semantics = [#tpu.dimension_semantics<parallel>], iteration_bounds = array<i64: 1>, scalar_prefetch = 0 : i64, scratch_operands = 0 : i64, tpu.core_type = #tpu.core_type<tc>, window_params = [{transform_indices = @transform_0, window_bounds = array<i64: 64, 32>}, {pipeline_mode = #tpu.pipeline_mode<synchronous>, transform_indices = @transform_1, window_bounds = array<i64: 32, 128>}, {pipeline_mode = #tpu.pipeline_mode<synchronous>, transform_indices = @transform_2, window_bounds = array<i64: 1, 128>}, {transform_indices = @transform_3, window_bounds = array<i64: 64, 128>}]} {
    %c0 = arith.constant 0 : index
    %c0_0 = arith.constant 0 : index
    %0 = vector.load %arg1[%c0, %c0_0] : memref<64x32xbf16, #tpu.memory_space<vmem>>, vector<64x32xbf16>
    %c0_1 = arith.constant 0 : index
    %c0_2 = arith.constant 0 : index
    %1 = vector.load %arg2[%c0_1, %c0_2] : memref<32x128xbf16, #tpu.memory_space<vmem>>, vector<32x128xbf16>
    %cst = arith.constant dense<0.000000e+00> : vector<64x128xf32>
    %2 = tpu.matmul %0, %1, %cst {dimension_numbers = #tpu.dot_dimension_numbers<[1], [0], [0], [1], [0, 0, 1, 1], [], []>} : vector<64x32xbf16>, vector<32x128xbf16>, vector<64x128xf32> -> vector<64x128xf32>
    %c0_3 = arith.constant 0 : index
    %c0_4 = arith.constant 0 : index
    %3 = vector.load %arg3[%c0_3, %c0_4] : memref<1x128xf32, #tpu.memory_space<vmem>>, vector<1x128xf32>
    %4 = vector.broadcast %3 : vector<1x128xf32> to vector<64x128xf32>
    %5 = arith.addf %2, %4 : vector<64x128xf32>
    %c0_5 = arith.constant 0 : index
    %c0_6 = arith.constant 0 : index
    %6 = vector.load %arg4[%c0_5, %c0_6] : memref<64x128xf32, #tpu.memory_space<vmem>>, vector<64x128xf32>
    tpu.vector_store %arg4[%c0_5, %c0_6], %5 {strides = array<i32>} : memref<64x128xf32, #tpu.memory_space<vmem>>, vector<64x128xf32>,
    return
  }
  func.func @transform_0(%arg0: i32) -> (i32, i32) {
    %c0_i32 = arith.constant 0 : i32
    %c0_i32_0 = arith.constant 0 : i32
    return %arg0, %c0_i32 : i32, i32
  }
  func.func @transform_1(%arg0: i32) -> (i32, i32) {
    %c0_i32 = arith.constant 0 : i32
    %c0_i32_0 = arith.constant 0 : i32
    %c0_i32_1 = arith.constant 0 : i32
    return %c0_i32, %c0_i32_0 : i32, i32
  }
  func.func @transform_2(%arg0: i32) -> (i32, i32) {
    %c0_i32 = arith.constant 0 : i32
    %c0_i32_0 = arith.constant 0 : i32
    %c0_i32_1 = arith.constant 0 : i32
    return %c0_i32, %c0_i32_0 : i32, i32
  }
  func.func @transform_3(%arg0: i32) -> (i32, i32) {
    %c0_i32 = arith.constant 0 : i32
    %c0_i32_0 = arith.constant 0 : i32
    return %arg0, %c0_i32 : i32, i32
  }
}

</mosaic_0001>

<llo_original>
// kernel: tpu_custom_call.1
$region0: #{tpu_custom_call.1}
  #allocation0 [shape = 'u32[]', space=smem, size = 0x4, offset = 0x4, fixed_abs, tag = 'smem constant byte address 0x4 - core index']
  #allocation1 [shape = 'u32[144,128]{1,0:T(1,128)}', space=vmem, size = 0x12000, scoped, tag = 'internal scratch']
  %s0 = inlined_call_operand.vmem [shape: bf16[64,32], index: 0, kind: input, shape index: {}]
  %s1 = inlined_call_operand.vmem [shape: bf16[32,128], index: 1, kind: input, shape index: {}]
  %s2 = inlined_call_operand.vmem [shape: f32[1,128], index: 2, kind: input, shape index: {}]
  %s3 = inlined_call_operand.hbm [shape: f32[64,128], index: 3, kind: output, shape index: {}]
  %s4 = sld [smem:[#allocation0]]
  $region22: #{tpu_custom_call.1} parent=0
    _
  %s6 = ssub.s32 1, %s4
  %s7 = scalar_select 0, %s6, %s4
  $region1: #{tpu_custom_call.1} parent=0
    #allocation2 [shape = 'u8[32768]{0}', space=vmem, size = 0x8000, scoped, tag = 'output window, operand 0, single buffered']
    #allocation3 [shape = 's32[1]{0}', space=sflag, size = 0x4, scoped, tag = 'scoped memory for tpu_custom_call.1']
    %8 = vsyncpa [#allocation3], 0
    // Predicated region
    $region2: #{tpu_custom_call.1} parent=1 // pred_check
      _
    $region3: #{tpu_custom_call.1} parent=1 // pred_check_branch
      %10 = sbr.rel (0) target = $region5
    $region4: #{tpu_custom_call.1} parent=1 // pred_region
      _
    $region5: #{tpu_custom_call.1} parent=1 // pred_fallthru
      _
    // Predicated region
    $region6: #{tpu_custom_call.1} parent=1 // pred_check
      _
    $region7: #{tpu_custom_call.1} parent=1 // pred_check_branch
      %12 = sbr.rel (0) target = $region9
    $region8: #{tpu_custom_call.1} parent=1 // pred_region
      _
    $region9: #{tpu_custom_call.1} parent=1 // pred_fallthru
      _
    // Predicated region
    $region10: #{tpu_custom_call.1} parent=1 // pred_check
      _
    $region11: #{tpu_custom_call.1} parent=1 // pred_check_branch
      %14 = sbr.rel (0) target = $region13
    $region12: #{tpu_custom_call.1} parent=1 // pred_region
      _
    $region13: #{tpu_custom_call.1} parent=1 // pred_fallthru
      _
    %v16 = vld [vmem:[%s0] sm:$0xf]
    %v17 = vld [vmem:[%s0 + $0x4] sm:$0xf]
    %v18 = vld [vmem:[%s0 + $0x8] sm:$0xf]
    %v19 = vld [vmem:[%s0 + $0xc] sm:$0xf]
    %v20 = vld [vmem:[%s0 + $0x10] sm:$0xf]
    %v21 = vld [vmem:[%s0 + $0x14] sm:$0xf]
    %v22 = vld [vmem:[%s0 + $0x18] sm:$0xf]
    %v23 = vld [vmem:[%s0 + $0x1c] sm:$0xf]
    %v24 = vld [vmem:[%s1] sm:$0xf]
    %v25 = vld [vmem:[%s1 + $0x4] sm:$0xf]
    %v26 = vld [vmem:[%s1 + $0x8] sm:$0xf]
    %v27 = vld [vmem:[%s1 + $0xc] sm:$0xf]
    %v28 = vld [vmem:[%s2] sm:$0x1]
    %v30 = vlaneseq
    %v31 = vshrl.u32 %v30, 7
    %v32 = vsub.s32 0, %v31
    %v33 = vrot.slane %v28, %v32
    %v43 = vunpack.c.l.b16 %v16
    %v44 = vunpack.c.l.b16 %v17
    %v45 = vunpack.c.l.b16 %v18
    %v46 = vunpack.c.l.b16 %v19
    %v47 = vunpack.c.l.b16 %v20
    %v48 = vunpack.c.l.b16 %v21
    %v49 = vunpack.c.l.b16 %v22
    %v50 = vunpack.c.l.b16 %v23
    %v51 = vpack.c.b16 %v44, %v43
    %v52 = vpack.c.b16 %v46, %v45
    %v53 = vpack.c.b16 %v48, %v47
    %v54 = vpack.c.b16 %v50, %v49
    %v59 = vunpack.c.l.b16 %v24
    %v60 = vunpack.c.l.b16 %v25
    %v61 = vunpack.c.l.b16 %v26
    %v62 = vunpack.c.l.b16 %v27
    %v63 = vpack.c.b16 %v60, %v59
    %v64 = vpack.c.b16 %v62, %v61
    %vm67 = vcmask 261120
    %v69 = vsel %vm67, %v51, 0
    %v72 = vsel %vm67, %v52, 0
    %v75 = vsel %vm67, %v53, 0
    %v78 = vsel %vm67, %v54, 0
    %80 = vmatprep.subr.bf16.mxu0 0
    %81 = vmatpush1.bf16.msra.mxu0 %v63
    %82 = vmatprep.subr.bf16.mxu0 0
    %83 = vmatpush1.bf16.msra.mxu0 %v64
    %84 = vmatprep.subr.bf16.mxu0 0
    %85 = vmatpush1.bf16.msra.mxu0 0
    %86 = vmatprep.subr.bf16.mxu0 0
    %87 = vmatpush1.bf16.msra.mxu0 0
    %88 = vmatprep.subr.bf16.mxu0 0
    %89 = vmatpush1.bf16.msra.mxu0 0
    %90 = vmatprep.subr.bf16.mxu0 0
    %91 = vmatpush1.bf16.msra.mxu0 0
    %92 = vmatprep.subr.bf16.mxu0 0
    %93 = vmatpush1.bf16.msra.mxu0 0
    %94 = vmatprep.subr.bf16.mxu0 0
    %95 = vmatpush1.bf16.msra.mxu0 0
    %96 = vmatprep.subr.bf16.mxu0 0
    %97 = vmatpush1.bf16.msra.mxu0 0
    %98 = vmatprep.subr.bf16.mxu0 0
    %99 = vmatpush1.bf16.msra.mxu0 0
    %100 = vmatprep.subr.bf16.mxu0 0
    %101 = vmatpush1.bf16.msra.mxu0 0
    %102 = vmatprep.subr.bf16.mxu0 0
    %103 = vmatpush1.bf16.msra.mxu0 0
    %104 = vmatprep.subr.bf16.mxu0 0
    %105 = vmatpush1.bf16.msra.mxu0 0
    %106 = vmatprep.subr.bf16.mxu0 0
    %107 = vmatpush1.bf16.msra.mxu0 0
    %108 = vmatprep.subr.bf16.mxu0 0
    %109 = vmatpush1.bf16.msra.mxu0 0
    %110 = vmatprep.subr.bf16.mxu0 0
    %111 = vmatpush1.bf16.msra.mxu0 0
    %112 = vmatprep.mubr.bf16.mxu0 0
    %113 = vmatmul.mubr.bf16.gmra.mrb[0].mxu0 %v69
    %v114 = vpop.f32.mrb[0].mxu0
    %v115 = vadd.f32 %v33, %v114
    %v116 = vpop.f32.mrb[0].mxu0
    %v117 = vpop.f32.mrb[0].mxu0
    %v118 = vadd.f32 %v33, %v117
    %v119 = vpop.f32.mrb[0].mxu0
    %120 = vmatprep.mubr.bf16.mxu0 0
    %121 = vmatmul.mubr.bf16.gmra.mrb[0].mxu0 %v72
    %v122 = vpop.f32.mrb[0].mxu0
    %v123 = vadd.f32 %v33, %v122
    %v124 = vpop.f32.mrb[0].mxu0
    %v125 = vpop.f32.mrb[0].mxu0
    %v126 = vadd.f32 %v33, %v125
    %v127 = vpop.f32.mrb[0].mxu0
    %128 = vmatprep.mubr.bf16.mxu0 0
    %129 = vmatmul.mubr.bf16.gmra.mrb[0].mxu0 %v75
    %v130 = vpop.f32.mrb[0].mxu0
    %v131 = vadd.f32 %v33, %v130
    %v132 = vpop.f32.mrb[0].mxu0
    %v133 = vpop.f32.mrb[0].mxu0
    %v134 = vadd.f32 %v33, %v133
    %v135 = vpop.f32.mrb[0].mxu0
    %136 = vmatprep.mubr.bf16.mxu0 0
    %137 = vmatmul.mubr.bf16.gmra.mrb[0].mxu0 %v78
    %v138 = vpop.f32.mrb[0].mxu0
    %v139 = vadd.f32 %v33, %v138
    %v140 = vpop.f32.mrb[0].mxu0
    %v141 = vpop.f32.mrb[0].mxu0
    %v142 = vadd.f32 %v33, %v141
    %v143 = vpop.f32.mrb[0].mxu0
    %144 = vdwg.mxu0
    %145 = vst [vmem:[#allocation2] sm:$0xff] %v115
    %146 = vst [vmem:[#allocation2 + $0x8] sm:$0xff] %v118
    %147 = vst [vmem:[#allocation2 + $0x10] sm:$0xff] %v123
    %148 = vst [vmem:[#allocation2 + $0x18] sm:$0xff] %v126
    %149 = vst [vmem:[#allocation2 + $0x20] sm:$0xff] %v131
    %150 = vst [vmem:[#allocation2 + $0x28] sm:$0xff] %v134
    %151 = vst [vmem:[#allocation2 + $0x30] sm:$0xff] %v139
    %152 = vst [vmem:[#allocation2 + $0x38] sm:$0xff] %v142
    // Predicated region
    $region14: #{tpu_custom_call.1} parent=1 // pred_check
      _
    $region15: #{tpu_custom_call.1} parent=1 // pred_check_branch
      %154 = sbr.rel (0) target = $region17
    $region16: #{tpu_custom_call.1} parent=1 // pred_region
      %s156 = ssub.s32 1024, 1024
      %157 = vsyncadd [#allocation3], %s156
      %s158 = sshll.u32 [#allocation2], 4
      %s159 = int_to_ptr.vmem [resolvable:$true] %s158
      %164 = dma.vmem_to_hbm [thread:$0]  %s159, 1024, %s3, [#allocation3], 128, 128, 8
    $region17: #{tpu_custom_call.1} parent=1 // pred_fallthru
      _
    // Predicated region
    $region18: #{tpu_custom_call.1} parent=1 // pred_check
      _
    $region19: #{tpu_custom_call.1} parent=1 // pred_check_branch
      %166 = sbr.rel (0) target = $region21
    $region20: #{tpu_custom_call.1} parent=1 // pred_region
      %167 = dma.done [#allocation3], 1024
    $region21: #{tpu_custom_call.1} parent=1 // pred_fallthru
      _
    %168 = vsyncpa [#allocation3], 1

</llo_original>
